<compile_context>
chip_gen: v7x
topology: tpu7x:2x2x1
jax: 0.10.0
libtpu: 0.0.40
codegen_flags: <defaults>
</compile_context>

<pallas_src>
import functools

import jax
import jax.numpy as jnp
from jax import lax
from jax.experimental import pallas as pl
from jax.experimental.pallas import tpu as pltpu

BN_EPS = 1e-5
LANE = 128
_VMEM_BUDGET = 40 * 1024 * 1024   # keep per-call working set comfortably < 64 MiB (v7x)


def _round_up(v, m):
    return (v + m - 1) // m * m


# --------------------------------------------------------------------------
# Kernel 1: GCNConv1 (tiled over E rows) + per-tile BatchNorm partial sums.
# --------------------------------------------------------------------------
def _gcn1_kernel(ef_ref, cnt_ref, d_inv_ref, d_isq_ref, h_head_ref,
                 w1_ref, b1_ref, agg_ref, stats_ref, *, tile_m, num_edges):
    # H1 tile = EF @ W1 for this row tile (head rows are precomputed/resident).
    h_tile = jnp.dot(ef_ref[...], w1_ref[...],
                     preferred_element_type=jnp.float32)               # [TM, C]

    # Normalized GCN aggregation:
    #   D^-1 * H_tile  +  D^-1/2_row * (counts @ (D^-1/2_col * H_head))  +  b1
    cnt = cnt_ref[...].astype(jnp.float32).astype(jnp.bfloat16)        # int8 stream
    msg = jnp.dot(cnt, h_head_ref[...],
                  preferred_element_type=jnp.float32)                  # [TM, C]
    agg = d_inv_ref[...] * h_tile + d_isq_ref[...] * msg + b1_ref[...]
    agg_ref[...] = agg.astype(agg_ref.dtype)                           # bf16 round-trip

    # BatchNorm partial statistics in f32 (mask padding rows >= E).
    row0 = pl.program_id(0) * tile_m
    rows = lax.broadcasted_iota(jnp.int32, (tile_m, 1), 0) + row0
    a_m = jnp.where(rows < num_edges, agg, 0.0)
    stats_ref[0:1, :] = jnp.sum(a_m, axis=0, keepdims=True)            # sum
    stats_ref[1:2, :] = jnp.sum(a_m * a_m, axis=0, keepdims=True)      # sum of squares


# --------------------------------------------------------------------------
# Kernel 2: BatchNorm + ReLU + GCNConv2 with the Linear folded in.
# --------------------------------------------------------------------------
def _gcn2_kernel(agg_ref, cnt_ref, d_inv_ref, d_isq_ref, z_head_ref,
                 mean_ref, inv_std_ref, gamma_ref, beta_ref,
                 w23_ref, b23_ref, out_ref, *, transpose_out):
    a = agg_ref[...].astype(jnp.float32)
    h = jnp.maximum(
        (a - mean_ref[...]) * inv_std_ref[...] * gamma_ref[...] + beta_ref[...], 0.0)

    z_tile = jnp.dot(h.astype(jnp.bfloat16), w23_ref[...],
                     preferred_element_type=jnp.float32)               # [TM, O]
    cnt = cnt_ref[...].astype(jnp.float32).astype(jnp.bfloat16)
    msg = jnp.dot(cnt, z_head_ref[...],
                  preferred_element_type=jnp.float32)                  # [TM, O]
    out = d_inv_ref[...] * z_tile + d_isq_ref[...] * msg + b23_ref[...]

    if transpose_out:
        # out_dim == 1: only column 0 is meaningful.  Transpose (XLU) and write
        # a lane-dense [1, tile_m] row instead of a 128x-inflated [TM, 128] slab.
        out_ref[...] = out.T[0:1, :]
    else:
        out_ref[...] = out


# --------------------------------------------------------------------------
# VMEM working-set estimate (double-buffered tiles + residents) per pass.
# --------------------------------------------------------------------------
def _vmem_bytes(tile_m, npad, c2p, cp, op, transpose_out):
    db = 2
    p1 = db * (tile_m * c2p * 2 + tile_m * npad * 1 + tile_m * cp * 2
               + 2 * tile_m * 4 + 8 * cp * 4)
    p1 += db * (npad * cp * 2 + c2p * cp * 2 + cp * 4)
    out_b = tile_m * 4 if transpose_out else tile_m * op * 4
    p2 = db * (tile_m * cp * 2 + tile_m * npad * 1 + out_b + 2 * tile_m * 4)
    p2 += db * (npad * op * 2 + cp * op * 2 + 6 * cp * 4)
    return max(p1, p2)


# --------------------------------------------------------------------------
# Wrapper: gather edge features, build int8 counts + degrees, hoist the head
# transforms, run the two-pass pipeline with a tiny stats reduce in between.
# --------------------------------------------------------------------------
def edge_weight_predictor(x, edge_index, params, *, tile_m=None):
    x = x.astype(jnp.float32)
    n_nodes, c_in = x.shape
    num_edges = edge_index.shape[1]
    out_dim = params["w3"].shape[1]
    transpose_out = (out_dim == 1)

    # NOTE: as in the PyTorch module, edge_index entries must be < num_edges
    # (GCNConv infers num_nodes = E from edge_features.size(0)).
    src = edge_index[0].astype(jnp.int32)
    dst = edge_index[1].astype(jnp.int32)

    cp = _round_up(c_in, LANE)
    c2p = _round_up(2 * c_in, LANE)
    op = _round_up(out_dim, LANE)
    npad = _round_up(n_nodes, LANE)

    base = _round_up(max(num_edges, npad), LANE)
    if tile_m is None:
        tile_m = 512
    tile_m = max(LANE, _round_up(min(tile_m, base), LANE))
    while (tile_m > LANE and
           _vmem_bytes(tile_m, npad, c2p, cp, op, transpose_out) > _VMEM_BUDGET):
        tile_m = max(LANE, _round_up(tile_m // 2, LANE))
    epad = _round_up(base, tile_m)
    num_tiles = epad // tile_m

    vmem_limit = int(min(max(2 * _vmem_bytes(tile_m, npad, c2p, cp, op,
                                             transpose_out), 32 << 20), 96 << 20))
    cparams = pltpu.CompilerParams(dimension_semantics=("parallel",),
                                   vmem_limit_bytes=vmem_limit)

    # ---- edge features (gather + concat), zero-padded, bf16 -----------------
    ef = jnp.concatenate([x[src], x[dst]], axis=1)                    # [E, 2C]
    ef = jnp.pad(ef, ((0, epad - num_edges), (0, c2p - 2 * c_in)))
    ef_bf = ef.astype(jnp.bfloat16)

    # ---- degrees (bincount over dst) and int8 edge-count adjacency ----------
    deg = jnp.zeros((epad,), jnp.float32).at[dst].add(1.0) + 1.0      # in-deg + self loop
    d_inv_sqrt = lax.rsqrt(deg)
    d_inv = (1.0 / deg)[:, None]                                      # [Ep, 1]
    d_isq = d_inv_sqrt[:, None]                                       # [Ep, 1]
    counts = jnp.zeros((epad, npad), jnp.int8).at[dst, src].add(jnp.int8(1))
    # TODO(synk): on v7x, fp8(e4m3) counts would also be exact and halve VMEM tiles.

    # ---- padded / folded parameters ------------------------------------------
    def pad2(a, r, c):
        a = a.astype(jnp.float32)
        return jnp.pad(a, ((0, r - a.shape[0]), (0, c - a.shape[1])))

    w1 = pad2(params["w1"], c2p, cp).astype(jnp.bfloat16)
    b1 = pad2(params["b1"], 1, cp)
    gamma = pad2(params["gamma"], 1, cp)
    beta = pad2(params["beta"], 1, cp)
    w23_full = params["w2"] @ params["w3"]                            # fold Linear
    b23_full = params["b2"] @ params["w3"] + params["b3"]
    w23 = pad2(w23_full, cp, op).astype(jnp.bfloat16)
    b23 = pad2(b23_full, 1, op)

    # ---- hoisted head transform for pass 1 (once, not per tile) --------------
    h_head = jnp.dot(ef_bf[:npad], w1, preferred_element_type=jnp.float32)
    h_head_s = (d_isq[:npad] * h_head).astype(jnp.bfloat16)           # [Np, C]

    grid = (num_tiles,)

    # ---- pass 1: GCNConv1 + BN partial sums -----------------------------------
    agg1, stats = pl.pallas_call(
        functools.partial(_gcn1_kernel, tile_m=tile_m, num_edges=num_edges),
        grid=grid,
        in_specs=[
            pl.BlockSpec((tile_m, c2p), lambda i: (i, 0)),    # ef row tile
            pl.BlockSpec((tile_m, npad), lambda i: (i, 0)),   # int8 counts tile
            pl.BlockSpec((tile_m, 1), lambda i: (i, 0)),      # d^-1
            pl.BlockSpec((tile_m, 1), lambda i: (i, 0)),      # d^-1/2
            pl.BlockSpec((npad, cp), lambda i: (0, 0)),       # H_head (resident)
            pl.BlockSpec((c2p, cp), lambda i: (0, 0)),        # w1 (resident)
            pl.BlockSpec((1, cp), lambda i: (0, 0)),          # b1 (resident)
        ],
        out_specs=[
            pl.BlockSpec((tile_m, cp), lambda i: (i, 0)),     # agg1 (bf16)
            pl.BlockSpec((8, cp), lambda i: (i, 0)),          # per-tile BN stats
        ],
        out_shape=[
            jax.ShapeDtypeStruct((epad, cp), jnp.bfloat16),
            jax.ShapeDtypeStruct((num_tiles * 8, cp), jnp.float32),
        ],
        compiler_params=cparams,
    )(ef_bf, counts, d_inv, d_isq, h_head_s, w1, b1)

    # ---- tiny global BN-stat reduce (biased variance, train-mode BN) ----------
    stats = stats.reshape(num_tiles, 8, cp)
    total = jnp.sum(stats[:, 0, :], axis=0)
    total_sq = jnp.sum(stats[:, 1, :], axis=0)
    mean_flat = total / num_edges
    var_flat = jnp.maximum(total_sq / num_edges - mean_flat * mean_flat, 0.0)
    mean = mean_flat[None, :]
    inv_std = lax.rsqrt(var_flat + BN_EPS)[None, :]

    # ---- hoisted head transform for pass 2 (once, not per tile) ---------------
    agg_head = agg1[:npad].astype(jnp.float32)
    h2_head = jnp.maximum((agg_head - mean) * inv_std * gamma + beta, 0.0)
    z_head = jnp.dot(h2_head.astype(jnp.bfloat16), w23,
                     preferred_element_type=jnp.float32)
    z_head_s = (d_isq[:npad] * z_head).astype(jnp.bfloat16)           # [Np, O]

    if transpose_out:
        out_specs = pl.BlockSpec((1, tile_m), lambda i: (0, i))       # lane-dense row
        out_shape = jax.ShapeDtypeStruct((1, epad), jnp.float32)
    else:
        out_specs = pl.BlockSpec((tile_m, op), lambda i: (i, 0))
        out_shape = jax.ShapeDtypeStruct((epad, op), jnp.float32)

    # ---- pass 2: BN + ReLU + GCNConv2 (+ folded Linear) ------------------------
    out = pl.pallas_call(
        functools.partial(_gcn2_kernel, transpose_out=transpose_out),
        grid=grid,
        in_specs=[
            pl.BlockSpec((tile_m, cp), lambda i: (i, 0)),     # agg1 tile (bf16)
            pl.BlockSpec((tile_m, npad), lambda i: (i, 0)),   # int8 counts tile
            pl.BlockSpec((tile_m, 1), lambda i: (i, 0)),      # d^-1
            pl.BlockSpec((tile_m, 1), lambda i: (i, 0)),      # d^-1/2
            pl.BlockSpec((npad, op), lambda i: (0, 0)),       # Z_head (resident)
            pl.BlockSpec((1, cp), lambda i: (0, 0)),          # mean
            pl.BlockSpec((1, cp), lambda i: (0, 0)),          # inv_std
            pl.BlockSpec((1, cp), lambda i: (0, 0)),          # gamma
            pl.BlockSpec((1, cp), lambda i: (0, 0)),          # beta
            pl.BlockSpec((cp, op), lambda i: (0, 0)),         # w23 (folded)
            pl.BlockSpec((1, op), lambda i: (0, 0)),          # b23 (folded)
        ],
        out_specs=out_specs,
        out_shape=out_shape,
        compiler_params=cparams,
    )(agg1, counts, d_inv, d_isq, z_head_s, mean, inv_std, gamma, beta, w23, b23)

    if transpose_out:
        return out[0, :num_edges]                        # matches torch .squeeze()
    return jnp.squeeze(out[:num_edges, :out_dim])


# --------------------------------------------------------------------------
# Parameters (GCNConv weights stored pre-transposed as [in, out]).
# --------------------------------------------------------------------------
def init_params(key, in_channels, output_size):
    c, o = in_channels, output_size
    k1, k2, k3, k4, k5, k6 = jax.random.split(key, 6)
    scale = 0.1
    return {
        "w1": scale * jax.random.normal(k1, (2 * c, c), jnp.float32),
        "b1": scale * jax.random.normal(k2, (1, c), jnp.float32),
        "gamma": jnp.ones((1, c), jnp.float32),
        "beta": jnp.zeros((1, c), jnp.float32),
        "w2": scale * jax.random.normal(k3, (c, o), jnp.float32),
        "b2": scale * jax.random.normal(k4, (1, o), jnp.float32),
        "w3": scale * jax.random.normal(k5, (o, o), jnp.float32),
        "b3": scale * jax.random.normal(k6, (1, o), jnp.float32),
    }


# Pure-JAX dense reference (for sanity checking the fused kernels).
def _reference(x, edge_index, params):
    e = edge_index.shape[1]
    ef = jnp.concatenate([x[edge_index[0]], x[edge_index[1]]], axis=1)
    adj = (jnp.zeros((e, e), jnp.float32)
           .at[edge_index[1], edge_index[0]].add(1.0) + jnp.eye(e))
    deg = adj.sum(axis=1)
    dis = lax.rsqrt(deg)
    m = dis[:, None] * adj * dis[None, :]
    h = m @ (ef @ params["w1"]) + params["b1"]
    mean = h.mean(axis=0)
    var = ((h - mean) ** 2).mean(axis=0)
    h = (h - mean) * lax.rsqrt(var + BN_EPS) * params["gamma"] + params["beta"]
    h = jnp.maximum(h, 0.0)
    h = m @ (h @ params["w2"]) + params["b2"]
    h = h @ params["w3"] + params["b3"]
    return jnp.squeeze(h)


if __name__ == "__main__":
    key = jax.random.PRNGKey(0)
    N, C, O, E = 8, 4, 1, 16   # 8 nodes, 4 channels, scalar edge weight, 16 edges

    kx, kp = jax.random.split(key)
    x = jax.random.normal(kx, (N, C), jnp.float32)

    # deterministic edge_index with src != dst, node ids in [0, N) (< E)
    src = jnp.arange(E, dtype=jnp.int32) % N
    dst = (src + 1 + (jnp.arange(E, dtype=jnp.int32) // N)) % N
    edge_index = jnp.stack([src, dst], axis=0)       # [2, E]

    params = init_params(kp, C, O)

    out = edge_weight_predictor(x, edge_index, params)
    out = jax.block_until_ready(out)
    assert out.shape == (E,)                         # squeeze of [E, 1]
    assert jnp.all(jnp.isfinite(out))

    ref = _reference(x, edge_index, params)
    max_err = float(jnp.max(jnp.abs(out - ref)))
    assert max_err < 1e-2, f"mismatch vs reference: {max_err}"
    print("KERNEL_OK")
</pallas_src>

<mosaic_0001>
module attributes {stable_mosaic.version = 11 : i64} {
  func.func @_gcn1_kernel(%arg0: i32, %arg1: memref<128x128xbf16, #tpu.memory_space<vmem>>, %arg2: memref<128x128xi8, #tpu.memory_space<vmem>>, %arg3: memref<128x1xf32, #tpu.memory_space<vmem>>, %arg4: memref<128x1xf32, #tpu.memory_space<vmem>>, %arg5: memref<128x128xbf16, #tpu.memory_space<vmem>>, %arg6: memref<128x128xbf16, #tpu.memory_space<vmem>>, %arg7: memref<1x128xf32, #tpu.memory_space<vmem>>, %arg8: memref<128x128xbf16, #tpu.memory_space<vmem>>, %arg9: memref<8x128xf32, #tpu.memory_space<vmem>>) attributes {dimension_semantics = [#tpu.dimension_semantics<parallel>], iteration_bounds = array<i64: 1>, scalar_prefetch = 0 : i64, scratch_operands = 0 : i64, tpu.core_type = #tpu.core_type<tc>, window_params = [{transform_indices = @transform_0, window_bounds = array<i64: 128, 128>}, {transform_indices = @transform_1, window_bounds = array<i64: 128, 128>}, {transform_indices = @transform_2, window_bounds = array<i64: 128, 1>}, {transform_indices = @transform_3, window_bounds = array<i64: 128, 1>}, {pipeline_mode = #tpu.pipeline_mode<synchronous>, transform_indices = @transform_4, window_bounds = array<i64: 128, 128>}, {pipeline_mode = #tpu.pipeline_mode<synchronous>, transform_indices = @transform_5, window_bounds = array<i64: 128, 128>}, {pipeline_mode = #tpu.pipeline_mode<synchronous>, transform_indices = @transform_6, window_bounds = array<i64: 1, 128>}, {transform_indices = @transform_7, window_bounds = array<i64: 128, 128>}, {transform_indices = @transform_8, window_bounds = array<i64: 8, 128>}]} {
    %c0 = arith.constant 0 : index
    %c0_0 = arith.constant 0 : index
    %0 = vector.load %arg1[%c0, %c0_0] : memref<128x128xbf16, #tpu.memory_space<vmem>>, vector<128x128xbf16>
    %c0_1 = arith.constant 0 : index
    %c0_2 = arith.constant 0 : index
    %1 = vector.load %arg6[%c0_1, %c0_2] : memref<128x128xbf16, #tpu.memory_space<vmem>>, vector<128x128xbf16>
    %cst = arith.constant dense<0.000000e+00> : vector<128x128xf32>
    %2 = tpu.matmul %0, %1, %cst {dimension_numbers = #tpu.dot_dimension_numbers<[1], [0], [0], [1], [0, 0, 1, 1], [], []>} : vector<128x128xbf16>, vector<128x128xbf16>, vector<128x128xf32> -> vector<128x128xf32>
    %c0_3 = arith.constant 0 : index
    %c0_4 = arith.constant 0 : index
    %3 = vector.load %arg2[%c0_3, %c0_4] : memref<128x128xi8, #tpu.memory_space<vmem>>, vector<128x128xi8>
    %4 = arith.sitofp %3 : vector<128x128xi8> to vector<128x128xf32>
    %5 = arith.truncf %4 : vector<128x128xf32> to vector<128x128xbf16>
    %c0_5 = arith.constant 0 : index
    %c0_6 = arith.constant 0 : index
    %6 = vector.load %arg5[%c0_5, %c0_6] : memref<128x128xbf16, #tpu.memory_space<vmem>>, vector<128x128xbf16>
    %cst_7 = arith.constant dense<0.000000e+00> : vector<128x128xf32>
    %7 = tpu.matmul %5, %6, %cst_7 {dimension_numbers = #tpu.dot_dimension_numbers<[1], [0], [0], [1], [0, 0, 1, 1], [], []>} : vector<128x128xbf16>, vector<128x128xbf16>, vector<128x128xf32> -> vector<128x128xf32>
    %c0_8 = arith.constant 0 : index
    %c0_9 = arith.constant 0 : index
    %8 = vector.load %arg3[%c0_8, %c0_9] : memref<128x1xf32, #tpu.memory_space<vmem>>, vector<128x1xf32>
    %9 = vector.broadcast %8 : vector<128x1xf32> to vector<128x128xf32>
    %10 = arith.mulf %9, %2 : vector<128x128xf32>
    %c0_10 = arith.constant 0 : index
    %c0_11 = arith.constant 0 : index
    %11 = vector.load %arg4[%c0_10, %c0_11] : memref<128x1xf32, #tpu.memory_space<vmem>>, vector<128x1xf32>
    %12 = vector.broadcast %11 : vector<128x1xf32> to vector<128x128xf32>
    %13 = arith.mulf %12, %7 : vector<128x128xf32>
    %14 = arith.addf %10, %13 : vector<128x128xf32>
    %c0_12 = arith.constant 0 : index
    %c0_13 = arith.constant 0 : index
    %15 = vector.load %arg7[%c0_12, %c0_13] : memref<1x128xf32, #tpu.memory_space<vmem>>, vector<1x128xf32>
    %16 = vector.broadcast %15 : vector<1x128xf32> to vector<128x128xf32>
    %17 = arith.addf %14, %16 : vector<128x128xf32>
    %18 = arith.truncf %17 : vector<128x128xf32> to vector<128x128xbf16>
    %c0_14 = arith.constant 0 : index
    %c0_15 = arith.constant 0 : index
    %19 = vector.load %arg8[%c0_14, %c0_15] : memref<128x128xbf16, #tpu.memory_space<vmem>>, vector<128x128xbf16>
    tpu.vector_store %arg8[%c0_14, %c0_15], %18 {strides = array<i32>} : memref<128x128xbf16, #tpu.memory_space<vmem>>, vector<128x128xbf16>,
    %c128_i32 = arith.constant 128 : i32
    %20 = arith.muli %arg0, %c128_i32 : i32
    %21 = tpu.iota {dimensions = array<i32: 0>} : vector<128x1xi32>
    %22 = vector.broadcast %20 : i32 to vector<128x1xi32>
    %23 = arith.addi %21, %22 : vector<128x1xi32>
    %c16_i32 = arith.constant 16 : i32
    %24 = vector.broadcast %c16_i32 : i32 to vector<128x1xi32>
    %25 = arith.cmpi slt, %23, %24 : vector<128x1xi32>
    %cst_16 = arith.constant 0.000000e+00 : f32
    %26 = vector.shape_cast %25 : vector<128x1xi1> to vector<128x1xi1>
    %27 = vector.broadcast %26 : vector<128x1xi1> to vector<128x128xi1>
    %28 = vector.broadcast %cst_16 : f32 to vector<128x128xf32>
    %29 = arith.select %27, %17, %28 : vector<128x128xi1>, vector<128x128xf32>
    %cst_17 = arith.constant dense<0.000000e+00> : vector<128xf32>
    %30 = vector.multi_reduction <add>, %29, %cst_17 [0] : vector<128x128xf32> to vector<128xf32>
    %31 = vector.shape_cast %30 : vector<128xf32> to vector<1x128xf32>
    %c0_18 = arith.constant 0 : index
    %c0_19 = arith.constant 0 : index
    %32 = vector.load %arg9[%c0_18, %c0_19] : memref<8x128xf32, #tpu.memory_space<vmem>>, vector<1x128xf32>
    tpu.vector_store %arg9[%c0_18, %c0_19], %31 {strides = array<i32>} : memref<8x128xf32, #tpu.memory_space<vmem>>, vector<1x128xf32>,
    %33 = arith.mulf %29, %29 : vector<128x128xf32>
    %cst_20 = arith.constant dense<0.000000e+00> : vector<128xf32>
    %34 = vector.multi_reduction <add>, %33, %cst_20 [0] : vector<128x128xf32> to vector<128xf32>
    %35 = vector.shape_cast %34 : vector<128xf32> to vector<1x128xf32>
    %c1 = arith.constant 1 : index
    %c0_21 = arith.constant 0 : index
    %36 = vector.load %arg9[%c1, %c0_21] : memref<8x128xf32, #tpu.memory_space<vmem>>, vector<1x128xf32>
    tpu.vector_store %arg9[%c1, %c0_21], %35 {strides = array<i32>} : memref<8x128xf32, #tpu.memory_space<vmem>>, vector<1x128xf32>,
    return
  }
  func.func @transform_0(%arg0: i32) -> (i32, i32) {
    %c0_i32 = arith.constant 0 : i32
    %c0_i32_0 = arith.constant 0 : i32
    return %arg0, %c0_i32 : i32, i32
  }
  func.func @transform_1(%arg0: i32) -> (i32, i32) {
    %c0_i32 = arith.constant 0 : i32
    %c0_i32_0 = arith.constant 0 : i32
    return %arg0, %c0_i32 : i32, i32
  }
  func.func @transform_2(%arg0: i32) -> (i32, i32) {
    %c0_i32 = arith.constant 0 : i32
    %c0_i32_0 = arith.constant 0 : i32
    return %arg0, %c0_i32 : i32, i32
  }
  func.func @transform_3(%arg0: i32) -> (i32, i32) {
    %c0_i32 = arith.constant 0 : i32
    %c0_i32_0 = arith.constant 0 : i32
    return %arg0, %c0_i32 : i32, i32
  }
  func.func @transform_4(%arg0: i32) -> (i32, i32) {
    %c0_i32 = arith.constant 0 : i32
    %c0_i32_0 = arith.constant 0 : i32
    %c0_i32_1 = arith.constant 0 : i32
    return %c0_i32, %c0_i32_0 : i32, i32
  }
  func.func @transform_5(%arg0: i32) -> (i32, i32) {
    %c0_i32 = arith.constant 0 : i32
    %c0_i32_0 = arith.constant 0 : i32
    %c0_i32_1 = arith.constant 0 : i32
    return %c0_i32, %c0_i32_0 : i32, i32
  }
  func.func @transform_6(%arg0: i32) -> (i32, i32) {
    %c0_i32 = arith.constant 0 : i32
    %c0_i32_0 = arith.constant 0 : i32
    %c0_i32_1 = arith.constant 0 : i32
    return %c0_i32, %c0_i32_0 : i32, i32
  }
  func.func @transform_7(%arg0: i32) -> (i32, i32) {
    %c0_i32 = arith.constant 0 : i32
    %c0_i32_0 = arith.constant 0 : i32
    return %arg0, %c0_i32 : i32, i32
  }
  func.func @transform_8(%arg0: i32) -> (i32, i32) {
    %c0_i32 = arith.constant 0 : i32
    %c0_i32_0 = arith.constant 0 : i32
    return %arg0, %c0_i32 : i32, i32
  }
}

</mosaic_0001>

<llo_original>
// kernel: tpu_custom_call.1
$region0: #{tpu_custom_call.1}
  #allocation0 [shape = 'u32[]', space=smem, size = 0x4, offset = 0x4, fixed_abs, tag = 'smem constant byte address 0x4 - core index']
  #allocation1 [shape = 'u32[144,128]{1,0:T(1,128)}', space=vmem, size = 0x12000, scoped, tag = 'internal scratch']
  %s0 = inlined_call_operand.vmem [shape: bf16[128,128], index: 0, kind: input, shape index: {}]
  %s1 = inlined_call_operand.vmem [shape: s8[128,128], index: 1, kind: input, shape index: {}]
  %s2 = inlined_call_operand.vmem [shape: f32[128,1], index: 2, kind: input, shape index: {}]
  %s3 = inlined_call_operand.vmem [shape: f32[128,1], index: 3, kind: input, shape index: {}]
  %s4 = inlined_call_operand.vmem [shape: bf16[128,128], index: 4, kind: input, shape index: {}]
  %s5 = inlined_call_operand.vmem [shape: bf16[128,128], index: 5, kind: input, shape index: {}]
  %s6 = inlined_call_operand.vmem [shape: f32[1,128], index: 6, kind: input, shape index: {}]
  %s7 = inlined_call_operand.hbm [shape: bf16[128,128], index: 7, kind: output, shape index: {0}]
  %s8 = inlined_call_operand.hbm [shape: f32[8,128], index: 8, kind: output, shape index: {1}]
  %9 = xla_tuple %s7, %s8
  %s10 = sld [smem:[#allocation0]]
  $region46: #{tpu_custom_call.1} parent=0
    _
  %s12 = ssub.s32 1, %s10
  %s13 = scalar_select 0, %s12, %s10
  $region1: #{tpu_custom_call.1} parent=0
    #allocation2 [shape = 'u8[32768]{0}', space=vmem, size = 0x8000, scoped, tag = 'output window, operand 0, single buffered']
    #allocation3 [shape = 's32[1]{0}', space=sflag, size = 0x4, scoped, tag = 'scoped memory for tpu_custom_call.1']
    #allocation4 [shape = 'u8[4096]{0}', space=vmem, size = 0x1000, scoped, tag = 'output window, operand 1, single buffered']
    #allocation5 [shape = 's32[1]{0}', space=sflag, size = 0x4, scoped, tag = 'scoped memory for tpu_custom_call.1']
    %14 = vsyncpa [#allocation3], 0
    %15 = vsyncpa [#allocation5], 0
    // Predicated region
    $region2: #{tpu_custom_call.1} parent=1 // pred_check
      _
    $region3: #{tpu_custom_call.1} parent=1 // pred_check_branch
      %17 = sbr.rel (0) target = $region5
    $region4: #{tpu_custom_call.1} parent=1 // pred_region
      _
    $region5: #{tpu_custom_call.1} parent=1 // pred_fallthru
      _
    // Predicated region
    $region6: #{tpu_custom_call.1} parent=1 // pred_check
      _
    $region7: #{tpu_custom_call.1} parent=1 // pred_check_branch
      %19 = sbr.rel (0) target = $region9
    $region8: #{tpu_custom_call.1} parent=1 // pred_region
      _
    $region9: #{tpu_custom_call.1} parent=1 // pred_fallthru
      _
    // Predicated region
    $region10: #{tpu_custom_call.1} parent=1 // pred_check
      _
    $region11: #{tpu_custom_call.1} parent=1 // pred_check_branch
      %21 = sbr.rel (0) target = $region13
    $region12: #{tpu_custom_call.1} parent=1 // pred_region
      _
    $region13: #{tpu_custom_call.1} parent=1 // pred_fallthru
      _
    // Predicated region
    $region14: #{tpu_custom_call.1} parent=1 // pred_check
      _
    $region15: #{tpu_custom_call.1} parent=1 // pred_check_branch
      %23 = sbr.rel (0) target = $region17
    $region16: #{tpu_custom_call.1} parent=1 // pred_region
      _
    $region17: #{tpu_custom_call.1} parent=1 // pred_fallthru
      _
    // Predicated region
    $region18: #{tpu_custom_call.1} parent=1 // pred_check
      _
    $region19: #{tpu_custom_call.1} parent=1 // pred_check_branch
      %25 = sbr.rel (0) target = $region21
    $region20: #{tpu_custom_call.1} parent=1 // pred_region
      _
    $region21: #{tpu_custom_call.1} parent=1 // pred_fallthru
      _
    // Predicated region
    $region22: #{tpu_custom_call.1} parent=1 // pred_check
      _
    $region23: #{tpu_custom_call.1} parent=1 // pred_check_branch
      %27 = sbr.rel (0) target = $region25
    $region24: #{tpu_custom_call.1} parent=1 // pred_region
      _
    $region25: #{tpu_custom_call.1} parent=1 // pred_fallthru
      _
    // Predicated region
    $region26: #{tpu_custom_call.1} parent=1 // pred_check
      _
    $region27: #{tpu_custom_call.1} parent=1 // pred_check_branch
      %29 = sbr.rel (0) target = $region29
    $region28: #{tpu_custom_call.1} parent=1 // pred_region
      _
    $region29: #{tpu_custom_call.1} parent=1 // pred_fallthru
      _
    %v31 = vld [vmem:[%s0] sm:$0xf]
    %v32 = vld [vmem:[%s0 + $0x4] sm:$0xf]
    %v33 = vld [vmem:[%s0 + $0x8] sm:$0xf]
    %v34 = vld [vmem:[%s0 + $0xc] sm:$0xf]
    %v35 = vld [vmem:[%s0 + $0x10] sm:$0xf]
    %v36 = vld [vmem:[%s0 + $0x14] sm:$0xf]
    %v37 = vld [vmem:[%s0 + $0x18] sm:$0xf]
    %v38 = vld [vmem:[%s0 + $0x1c] sm:$0xf]
    %v39 = vld [vmem:[%s0 + $0x20] sm:$0xf]
    %v40 = vld [vmem:[%s0 + $0x24] sm:$0xf]
    %v41 = vld [vmem:[%s0 + $0x28] sm:$0xf]
    %v42 = vld [vmem:[%s0 + $0x2c] sm:$0xf]
    %v43 = vld [vmem:[%s0 + $0x30] sm:$0xf]
    %v44 = vld [vmem:[%s0 + $0x34] sm:$0xf]
    %v45 = vld [vmem:[%s0 + $0x38] sm:$0xf]
    %v46 = vld [vmem:[%s0 + $0x3c] sm:$0xf]
    %v47 = vld [vmem:[%s5] sm:$0xf]
    %v48 = vld [vmem:[%s5 + $0x4] sm:$0xf]
    %v49 = vld [vmem:[%s5 + $0x8] sm:$0xf]
    %v50 = vld [vmem:[%s5 + $0xc] sm:$0xf]
    %v51 = vld [vmem:[%s5 + $0x10] sm:$0xf]
    %v52 = vld [vmem:[%s5 + $0x14] sm:$0xf]
    %v53 = vld [vmem:[%s5 + $0x18] sm:$0xf]
    %v54 = vld [vmem:[%s5 + $0x1c] sm:$0xf]
    %v55 = vld [vmem:[%s5 + $0x20] sm:$0xf]
    %v56 = vld [vmem:[%s5 + $0x24] sm:$0xf]
    %v57 = vld [vmem:[%s5 + $0x28] sm:$0xf]
    %v58 = vld [vmem:[%s5 + $0x2c] sm:$0xf]
    %v59 = vld [vmem:[%s5 + $0x30] sm:$0xf]
    %v60 = vld [vmem:[%s5 + $0x34] sm:$0xf]
    %v61 = vld [vmem:[%s5 + $0x38] sm:$0xf]
    %v62 = vld [vmem:[%s5 + $0x3c] sm:$0xf]
    %v79 = vunpack.c.l.b16 %v31
    %v80 = vunpack.c.l.b16 %v32
    %v81 = vunpack.c.l.b16 %v33
    %v82 = vunpack.c.l.b16 %v34
    %v83 = vunpack.c.l.b16 %v35
    %v84 = vunpack.c.l.b16 %v36
    %v85 = vunpack.c.l.b16 %v37
    %v86 = vunpack.c.l.b16 %v38
    %v87 = vunpack.c.l.b16 %v39
    %v88 = vunpack.c.l.b16 %v40
    %v89 = vunpack.c.l.b16 %v41
    %v90 = vunpack.c.l.b16 %v42
    %v91 = vunpack.c.l.b16 %v43
    %v92 = vunpack.c.l.b16 %v44
    %v93 = vunpack.c.l.b16 %v45
    %v94 = vunpack.c.l.b16 %v46
    %v95 = vpack.c.b16 %v80, %v79
    %v96 = vpack.c.b16 %v82, %v81
    %v97 = vpack.c.b16 %v84, %v83
    %v98 = vpack.c.b16 %v86, %v85
    %v99 = vpack.c.b16 %v88, %v87
    %v100 = vpack.c.b16 %v90, %v89
    %v101 = vpack.c.b16 %v92, %v91
    %v102 = vpack.c.b16 %v94, %v93
    %v127 = vunpack.c.l.b16 %v47
    %v128 = vunpack.c.l.b16 %v48
    %v129 = vunpack.c.l.b16 %v49
    %v130 = vunpack.c.l.b16 %v50
    %v131 = vunpack.c.l.b16 %v51
    %v132 = vunpack.c.l.b16 %v52
    %v133 = vunpack.c.l.b16 %v53
    %v134 = vunpack.c.l.b16 %v54
    %v135 = vunpack.c.l.b16 %v55
    %v136 = vunpack.c.l.b16 %v56
    %v137 = vunpack.c.l.b16 %v57
    %v138 = vunpack.c.l.b16 %v58
    %v139 = vunpack.c.l.b16 %v59
    %v140 = vunpack.c.l.b16 %v60
    %v141 = vunpack.c.l.b16 %v61
    %v142 = vunpack.c.l.b16 %v62
    %v143 = vpack.c.b16 %v128, %v127
    %v144 = vpack.c.b16 %v130, %v129
    %v145 = vpack.c.b16 %v132, %v131
    %v146 = vpack.c.b16 %v134, %v133
    %v147 = vpack.c.b16 %v136, %v135
    %v148 = vpack.c.b16 %v138, %v137
    %v149 = vpack.c.b16 %v140, %v139
    %v150 = vpack.c.b16 %v142, %v141
    %159 = vmatprep.subr.bf16.mxu0 0
    %160 = vmatpush1.bf16.msra.mxu0 %v143
    %161 = vmatprep.subr.bf16.mxu0 0
    %162 = vmatpush1.bf16.msra.mxu0 %v144
    %163 = vmatprep.subr.bf16.mxu0 0
    %164 = vmatpush1.bf16.msra.mxu0 %v145
    %165 = vmatprep.subr.bf16.mxu0 0
    %166 = vmatpush1.bf16.msra.mxu0 %v146
    %167 = vmatprep.subr.bf16.mxu0 0
    %168 = vmatpush1.bf16.msra.mxu0 %v147
    %169 = vmatprep.subr.bf16.mxu0 0
    %170 = vmatpush1.bf16.msra.mxu0 %v148
    %171 = vmatprep.subr.bf16.mxu0 0
    %172 = vmatpush1.bf16.msra.mxu0 %v149
    %173 = vmatprep.subr.bf16.mxu0 0
    %174 = vmatpush1.bf16.msra.mxu0 %v150
    %175 = vmatprep.subr.bf16.mxu0 0
    %176 = vmatpush1.bf16.msra.mxu0 0
    %177 = vmatprep.subr.bf16.mxu0 0
    %178 = vmatpush1.bf16.msra.mxu0 0
    %179 = vmatprep.subr.bf16.mxu0 0
    %180 = vmatpush1.bf16.msra.mxu0 0
    %181 = vmatprep.subr.bf16.mxu0 0
    %182 = vmatpush1.bf16.msra.mxu0 0
    %183 = vmatprep.subr.bf16.mxu0 0
    %184 = vmatpush1.bf16.msra.mxu0 0
    %185 = vmatprep.subr.bf16.mxu0 0
    %186 = vmatpush1.bf16.msra.mxu0 0
    %187 = vmatprep.subr.bf16.mxu0 0
    %188 = vmatpush1.bf16.msra.mxu0 0
    %189 = vmatprep.subr.bf16.mxu0 0
    %190 = vmatpush1.bf16.msra.mxu0 0
    %191 = vmatprep.mubr.bf16.mxu0 0
    %192 = vmatmul.mubr.bf16.gmra.mrb[0].mxu0 %v95
    %v193 = vpop.f32.mrb[0].mxu0
    %v194 = vadd.f32 0.0, %v193
    %v195 = vpop.f32.mrb[0].mxu0
    %v196 = vpop.f32.mrb[0].mxu0
    %v197 = vadd.f32 0.0, %v196
    %v198 = vpop.f32.mrb[0].mxu0
    %199 = vmatprep.mubr.bf16.mxu0 0
    %200 = vmatmul.mubr.bf16.gmra.mrb[0].mxu0 %v96
    %v201 = vpop.f32.mrb[0].mxu0
    %v202 = vadd.f32 0.0, %v201
    %v203 = vpop.f32.mrb[0].mxu0
    %v204 = vpop.f32.mrb[0].mxu0
    %v205 = vadd.f32 0.0, %v204
    %v206 = vpop.f32.mrb[0].mxu0
    %207 = vmatprep.mubr.bf16.mxu0 0
    %208 = vmatmul.mubr.bf16.gmra.mrb[0].mxu0 %v97
    %v209 = vpop.f32.mrb[0].mxu0
    %v210 = vadd.f32 0.0, %v209
    %v211 = vpop.f32.mrb[0].mxu0
    %v212 = vpop.f32.mrb[0].mxu0
    %v213 = vadd.f32 0.0, %v212
    %v214 = vpop.f32.mrb[0].mxu0
    %215 = vmatprep.mubr.bf16.mxu0 0
    %216 = vmatmul.mubr.bf16.gmra.mrb[0].mxu0 %v98
    %v217 = vpop.f32.mrb[0].mxu0
    %v218 = vadd.f32 0.0, %v217
    %v219 = vpop.f32.mrb[0].mxu0
    %v220 = vpop.f32.mrb[0].mxu0
    %v221 = vadd.f32 0.0, %v220
    %v222 = vpop.f32.mrb[0].mxu0
    %223 = vmatprep.mubr.bf16.mxu0 0
    %224 = vmatmul.mubr.bf16.gmra.mrb[0].mxu0 %v99
    %v225 = vpop.f32.mrb[0].mxu0
    %v226 = vadd.f32 0.0, %v225
    %v227 = vpop.f32.mrb[0].mxu0
    %v228 = vpop.f32.mrb[0].mxu0
    %v229 = vadd.f32 0.0, %v228
    %v230 = vpop.f32.mrb[0].mxu0
    %231 = vmatprep.mubr.bf16.mxu0 0
    %232 = vmatmul.mubr.bf16.gmra.mrb[0].mxu0 %v100
    %v233 = vpop.f32.mrb[0].mxu0
    %v234 = vadd.f32 0.0, %v233
    %v235 = vpop.f32.mrb[0].mxu0
    %v236 = vpop.f32.mrb[0].mxu0
    %v237 = vadd.f32 0.0, %v236
    %v238 = vpop.f32.mrb[0].mxu0
    %239 = vmatprep.mubr.bf16.mxu0 0
    %240 = vmatmul.mubr.bf16.gmra.mrb[0].mxu0 %v101
    %v241 = vpop.f32.mrb[0].mxu0
    %v242 = vadd.f32 0.0, %v241
    %v243 = vpop.f32.mrb[0].mxu0
    %v244 = vpop.f32.mrb[0].mxu0
    %v245 = vadd.f32 0.0, %v244
    %v246 = vpop.f32.mrb[0].mxu0
    %247 = vmatprep.mubr.bf16.mxu0 0
    %248 = vmatmul.mubr.bf16.gmra.mrb[0].mxu0 %v102
    %v249 = vpop.f32.mrb[0].mxu0
    %v250 = vadd.f32 0.0, %v249
    %v251 = vpop.f32.mrb[0].mxu0
    %v252 = vpop.f32.mrb[0].mxu0
    %v253 = vadd.f32 0.0, %v252
    %v254 = vpop.f32.mrb[0].mxu0
    %255 = vdwg.mxu0
    %v256 = vld [vmem:[%s1] sm:$0xff]
    %v257 = vld [vmem:[%s1 + $0x8] sm:$0xff]
    %v258 = vld [vmem:[%s1 + $0x10] sm:$0xff]
    %v259 = vld [vmem:[%s1 + $0x18] sm:$0xff]
    %v260 = vunpack.c.l.s8.bf16 %v256
    %v261 = vunpack.c.h.s8.bf16 %v256
    %v262 = vunpack.c.l.s8.bf16 %v257
    %v263 = vunpack.c.h.s8.bf16 %v257
    %v264 = vunpack.c.l.s8.bf16 %v258
    %v265 = vunpack.c.h.s8.bf16 %v258
    %v266 = vunpack.c.l.s8.bf16 %v259
    %v267 = vunpack.c.h.s8.bf16 %v259
    %v268 = vld [vmem:[%s4] sm:$0xf]
    %v269 = vld [vmem:[%s4 + $0x4] sm:$0xf]
    %v270 = vld [vmem:[%s4 + $0x8] sm:$0xf]
    %v271 = vld [vmem:[%s4 + $0xc] sm:$0xf]
    %v272 = vld [vmem:[%s4 + $0x10] sm:$0xf]
    %v273 = vld [vmem:[%s4 + $0x14] sm:$0xf]
    %v274 = vld [vmem:[%s4 + $0x18] sm:$0xf]
    %v275 = vld [vmem:[%s4 + $0x1c] sm:$0xf]
    %v276 = vld [vmem:[%s4 + $0x20] sm:$0xf]
    %v277 = vld [vmem:[%s4 + $0x24] sm:$0xf]
    %v278 = vld [vmem:[%s4 + $0x28] sm:$0xf]
    %v279 = vld [vmem:[%s4 + $0x2c] sm:$0xf]
    %v280 = vld [vmem:[%s4 + $0x30] sm:$0xf]
    %v281 = vld [vmem:[%s4 + $0x34] sm:$0xf]
    %v282 = vld [vmem:[%s4 + $0x38] sm:$0xf]
    %v283 = vld [vmem:[%s4 + $0x3c] sm:$0xf]
    %v300 = vunpack.c.l.b16 %v268
    %v301 = vunpack.c.l.b16 %v269
    %v302 = vunpack.c.l.b16 %v270
    %v303 = vunpack.c.l.b16 %v271
    %v304 = vunpack.c.l.b16 %v272
    %v305 = vunpack.c.l.b16 %v273
    %v306 = vunpack.c.l.b16 %v274
    %v307 = vunpack.c.l.b16 %v275
    %v308 = vunpack.c.l.b16 %v276
    %v309 = vunpack.c.l.b16 %v277
    %v310 = vunpack.c.l.b16 %v278
    %v311 = vunpack.c.l.b16 %v279
    %v312 = vunpack.c.l.b16 %v280
    %v313 = vunpack.c.l.b16 %v281
    %v314 = vunpack.c.l.b16 %v282
    %v315 = vunpack.c.l.b16 %v283
    %v316 = vpack.c.b16 %v301, %v300
    %v317 = vpack.c.b16 %v303, %v302
    %v318 = vpack.c.b16 %v305, %v304
    %v319 = vpack.c.b16 %v307, %v306
    %v320 = vpack.c.b16 %v309, %v308
    %v321 = vpack.c.b16 %v311, %v310
    %v322 = vpack.c.b16 %v313, %v312
    %v323 = vpack.c.b16 %v315, %v314
    %332 = vmatprep.subr.bf16.mxu0 0
    %333 = vmatpush1.bf16.msra.mxu0 %v316
    %334 = vmatprep.subr.bf16.mxu0 0
    %335 = vmatpush1.bf16.msra.mxu0 %v317
    %336 = vmatprep.subr.bf16.mxu0 0
    %337 = vmatpush1.bf16.msra.mxu0 %v318
    %338 = vmatprep.subr.bf16.mxu0 0
    %339 = vmatpush1.bf16.msra.mxu0 %v319
    %340 = vmatprep.subr.bf16.mxu0 0
    %341 = vmatpush1.bf16.msra.mxu0 %v320
    %342 = vmatprep.subr.bf16.mxu0 0
    %343 = vmatpush1.bf16.msra.mxu0 %v321
    %344 = vmatprep.subr.bf16.mxu0 0
    %345 = vmatpush1.bf16.msra.mxu0 %v322
    %346 = vmatprep.subr.bf16.mxu0 0
    %347 = vmatpush1.bf16.msra.mxu0 %v323
    %348 = vmatprep.subr.bf16.mxu0 0
    %349 = vmatpush1.bf16.msra.mxu0 0
    %350 = vmatprep.subr.bf16.mxu0 0
    %351 = vmatpush1.bf16.msra.mxu0 0
    %352 = vmatprep.subr.bf16.mxu0 0
    %353 = vmatpush1.bf16.msra.mxu0 0
    %354 = vmatprep.subr.bf16.mxu0 0
    %355 = vmatpush1.bf16.msra.mxu0 0
    %356 = vmatprep.subr.bf16.mxu0 0
    %357 = vmatpush1.bf16.msra.mxu0 0
    %358 = vmatprep.subr.bf16.mxu0 0
    %359 = vmatpush1.bf16.msra.mxu0 0
    %360 = vmatprep.subr.bf16.mxu0 0
    %361 = vmatpush1.bf16.msra.mxu0 0
    %362 = vmatprep.subr.bf16.mxu0 0
    %363 = vmatpush1.bf16.msra.mxu0 0
    %364 = vmatprep.mubr.bf16.mxu0 0
    %365 = vmatmul.mubr.bf16.gmra.mrb[0].mxu0 %v260
    %v366 = vpop.f32.mrb[0].mxu0
    %v367 = vadd.f32 0.0, %v366
    %v368 = vpop.f32.mrb[0].mxu0
    %v369 = vpop.f32.mrb[0].mxu0
    %v370 = vadd.f32 0.0, %v369
    %v371 = vpop.f32.mrb[0].mxu0
    %372 = vmatprep.mubr.bf16.mxu0 0
    %373 = vmatmul.mubr.bf16.gmra.mrb[0].mxu0 %v261
    %v374 = vpop.f32.mrb[0].mxu0
    %v375 = vadd.f32 0.0, %v374
    %v376 = vpop.f32.mrb[0].mxu0
    %v377 = vpop.f32.mrb[0].mxu0
    %v378 = vadd.f32 0.0, %v377
    %v379 = vpop.f32.mrb[0].mxu0
    %380 = vmatprep.mubr.bf16.mxu0 0
    %381 = vmatmul.mubr.bf16.gmra.mrb[0].mxu0 %v262
    %v382 = vpop.f32.mrb[0].mxu0
    %v383 = vadd.f32 0.0, %v382
    %v384 = vpop.f32.mrb[0].mxu0
    %v385 = vpop.f32.mrb[0].mxu0
    %v386 = vadd.f32 0.0, %v385
    %v387 = vpop.f32.mrb[0].mxu0
    %388 = vmatprep.mubr.bf16.mxu0 0
    %389 = vmatmul.mubr.bf16.gmra.mrb[0].mxu0 %v263
    %v390 = vpop.f32.mrb[0].mxu0
    %v391 = vadd.f32 0.0, %v390
    %v392 = vpop.f32.mrb[0].mxu0
    %v393 = vpop.f32.mrb[0].mxu0
    %v394 = vadd.f32 0.0, %v393
    %v395 = vpop.f32.mrb[0].mxu0
    %396 = vmatprep.mubr.bf16.mxu0 0
    %397 = vmatmul.mubr.bf16.gmra.mrb[0].mxu0 %v264
    %v398 = vpop.f32.mrb[0].mxu0
    %v399 = vadd.f32 0.0, %v398
    %v400 = vpop.f32.mrb[0].mxu0
    %v401 = vpop.f32.mrb[0].mxu0
    %v402 = vadd.f32 0.0, %v401
    %v403 = vpop.f32.mrb[0].mxu0
    %404 = vmatprep.mubr.bf16.mxu0 0
    %405 = vmatmul.mubr.bf16.gmra.mrb[0].mxu0 %v265
    %v406 = vpop.f32.mrb[0].mxu0
    %v407 = vadd.f32 0.0, %v406
    %v408 = vpop.f32.mrb[0].mxu0
    %v409 = vpop.f32.mrb[0].mxu0
    %v410 = vadd.f32 0.0, %v409
    %v411 = vpop.f32.mrb[0].mxu0
    %412 = vmatprep.mubr.bf16.mxu0 0
    %413 = vmatmul.mubr.bf16.gmra.mrb[0].mxu0 %v266
    %v414 = vpop.f32.mrb[0].mxu0
    %v415 = vadd.f32 0.0, %v414
    %v416 = vpop.f32.mrb[0].mxu0
    %v417 = vpop.f32.mrb[0].mxu0
    %v418 = vadd.f32 0.0, %v417
    %v419 = vpop.f32.mrb[0].mxu0
    %420 = vmatprep.mubr.bf16.mxu0 0
    %421 = vmatmul.mubr.bf16.gmra.mrb[0].mxu0 %v267
    %v422 = vpop.f32.mrb[0].mxu0
    %v423 = vadd.f32 0.0, %v422
    %v424 = vpop.f32.mrb[0].mxu0
    %v425 = vpop.f32.mrb[0].mxu0
    %v426 = vadd.f32 0.0, %v425
    %v427 = vpop.f32.mrb[0].mxu0
    %428 = vdwg.mxu0
    %v429 = vld [vmem:[%s2] sm:$0xff]
    %v430 = vld [vmem:[%s2 + $0x8] sm:$0xff]
    %v431 = vld [vmem:[%s2 + $0x10] sm:$0xff]
    %v432 = vld [vmem:[%s2 + $0x18] sm:$0xff]
    %v433 = vld [vmem:[%s2 + $0x20] sm:$0xff]
    %v434 = vld [vmem:[%s2 + $0x28] sm:$0xff]
    %v435 = vld [vmem:[%s2 + $0x30] sm:$0xff]
    %v436 = vld [vmem:[%s2 + $0x38] sm:$0xff]
    %v437 = vld [vmem:[%s2 + $0x40] sm:$0xff]
    %v438 = vld [vmem:[%s2 + $0x48] sm:$0xff]
    %v439 = vld [vmem:[%s2 + $0x50] sm:$0xff]
    %v440 = vld [vmem:[%s2 + $0x58] sm:$0xff]
    %v441 = vld [vmem:[%s2 + $0x60] sm:$0xff]
    %v442 = vld [vmem:[%s2 + $0x68] sm:$0xff]
    %v443 = vld [vmem:[%s2 + $0x70] sm:$0xff]
    %v444 = vld [vmem:[%s2 + $0x78] sm:$0xff]
    %446 = vset.pattern.permute.xlu0 0
    %447 = vperm.xlu0 %446, %v429
    %v448 = vpop.permute.xlu0 %447
    %451 = vset.pattern.permute.xlu0 0
    %452 = vperm.xlu0 %451, %v430
    %v453 = vpop.permute.xlu0 %452
    %456 = vset.pattern.permute.xlu0 0
    %457 = vperm.xlu0 %456, %v431
    %v458 = vpop.permute.xlu0 %457
    %461 = vset.pattern.permute.xlu0 0
    %462 = vperm.xlu0 %461, %v432
    %v463 = vpop.permute.xlu0 %462
    %466 = vset.pattern.permute.xlu0 0
    %467 = vperm.xlu0 %466, %v433
    %v468 = vpop.permute.xlu0 %467
    %471 = vset.pattern.permute.xlu0 0
    %472 = vperm.xlu0 %471, %v434
    %v473 = vpop.permute.xlu0 %472
    %476 = vset.pattern.permute.xlu0 0
    %477 = vperm.xlu0 %476, %v435
    %v478 = vpop.permute.xlu0 %477
    %481 = vset.pattern.permute.xlu0 0
    %482 = vperm.xlu0 %481, %v436
    %v483 = vpop.permute.xlu0 %482
    %486 = vset.pattern.permute.xlu0 0
    %487 = vperm.xlu0 %486, %v437
    %v488 = vpop.permute.xlu0 %487
    %491 = vset.pattern.permute.xlu0 0
    %492 = vperm.xlu0 %491, %v438
    %v493 = vpop.permute.xlu0 %492
    %496 = vset.pattern.permute.xlu0 0
    %497 = vperm.xlu0 %496, %v439
    %v498 = vpop.permute.xlu0 %497
    %501 = vset.pattern.permute.xlu0 0
    %502 = vperm.xlu0 %501, %v440
    %v503 = vpop.permute.xlu0 %502
    %506 = vset.pattern.permute.xlu0 0
    %507 = vperm.xlu0 %506, %v441
    %v508 = vpop.permute.xlu0 %507
    %511 = vset.pattern.permute.xlu0 0
    %512 = vperm.xlu0 %511, %v442
    %v513 = vpop.permute.xlu0 %512
    %516 = vset.pattern.permute.xlu0 0
    %517 = vperm.xlu0 %516, %v443
    %v518 = vpop.permute.xlu0 %517
    %521 = vset.pattern.permute.xlu0 0
    %522 = vperm.xlu0 %521, %v444
    %v523 = vpop.permute.xlu0 %522
    %v525 = vmul.f32 %v448, %v194
    %v526 = vmul.f32 %v453, %v197
    %v527 = vmul.f32 %v458, %v202
    %v528 = vmul.f32 %v463, %v205
    %v529 = vmul.f32 %v468, %v210
    %v530 = vmul.f32 %v473, %v213
    %v531 = vmul.f32 %v478, %v218
    %v532 = vmul.f32 %v483, %v221
    %v533 = vmul.f32 %v488, %v226
    %v534 = vmul.f32 %v493, %v229
    %v535 = vmul.f32 %v498, %v234
    %v536 = vmul.f32 %v503, %v237
    %v537 = vmul.f32 %v508, %v242
    %v538 = vmul.f32 %v513, %v245
    %v539 = vmul.f32 %v518, %v250
    %v540 = vmul.f32 %v523, %v253
    %v541 = vld [vmem:[%s3] sm:$0xff]
    %v542 = vld [vmem:[%s3 + $0x8] sm:$0xff]
    %v543 = vld [vmem:[%s3 + $0x10] sm:$0xff]
    %v544 = vld [vmem:[%s3 + $0x18] sm:$0xff]
    %v545 = vld [vmem:[%s3 + $0x20] sm:$0xff]
    %v546 = vld [vmem:[%s3 + $0x28] sm:$0xff]
    %v547 = vld [vmem:[%s3 + $0x30] sm:$0xff]
    %v548 = vld [vmem:[%s3 + $0x38] sm:$0xff]
    %v549 = vld [vmem:[%s3 + $0x40] sm:$0xff]
    %v550 = vld [vmem:[%s3 + $0x48] sm:$0xff]
    %v551 = vld [vmem:[%s3 + $0x50] sm:$0xff]
    %v552 = vld [vmem:[%s3 + $0x58] sm:$0xff]
    %v553 = vld [vmem:[%s3 + $0x60] sm:$0xff]
    %v554 = vld [vmem:[%s3 + $0x68] sm:$0xff]
    %v555 = vld [vmem:[%s3 + $0x70] sm:$0xff]
    %v556 = vld [vmem:[%s3 + $0x78] sm:$0xff]
    %558 = vset.pattern.permute.xlu0 0
    %559 = vperm.xlu0 %558, %v541
    %v560 = vpop.permute.xlu0 %559
    %563 = vset.pattern.permute.xlu0 0
    %564 = vperm.xlu0 %563, %v542
    %v565 = vpop.permute.xlu0 %564
    %568 = vset.pattern.permute.xlu0 0
    %569 = vperm.xlu0 %568, %v543
    %v570 = vpop.permute.xlu0 %569
    %573 = vset.pattern.permute.xlu0 0
    %574 = vperm.xlu0 %573, %v544
    %v575 = vpop.permute.xlu0 %574
    %578 = vset.pattern.permute.xlu0 0
    %579 = vperm.xlu0 %578, %v545
    %v580 = vpop.permute.xlu0 %579
    %583 = vset.pattern.permute.xlu0 0
    %584 = vperm.xlu0 %583, %v546
    %v585 = vpop.permute.xlu0 %584
    %588 = vset.pattern.permute.xlu0 0
    %589 = vperm.xlu0 %588, %v547
    %v590 = vpop.permute.xlu0 %589
    %593 = vset.pattern.permute.xlu0 0
    %594 = vperm.xlu0 %593, %v548
    %v595 = vpop.permute.xlu0 %594
    %598 = vset.pattern.permute.xlu0 0
    %599 = vperm.xlu0 %598, %v549
    %v600 = vpop.permute.xlu0 %599
    %603 = vset.pattern.permute.xlu0 0
    %604 = vperm.xlu0 %603, %v550
    %v605 = vpop.permute.xlu0 %604
    %608 = vset.pattern.permute.xlu0 0
    %609 = vperm.xlu0 %608, %v551
    %v610 = vpop.permute.xlu0 %609
    %613 = vset.pattern.permute.xlu0 0
    %614 = vperm.xlu0 %613, %v552
    %v615 = vpop.permute.xlu0 %614
    %618 = vset.pattern.permute.xlu0 0
    %619 = vperm.xlu0 %618, %v553
    %v620 = vpop.permute.xlu0 %619
    %623 = vset.pattern.permute.xlu0 0
    %624 = vperm.xlu0 %623, %v554
    %v625 = vpop.permute.xlu0 %624
    %628 = vset.pattern.permute.xlu0 0
    %629 = vperm.xlu0 %628, %v555
    %v630 = vpop.permute.xlu0 %629
    %633 = vset.pattern.permute.xlu0 0
    %634 = vperm.xlu0 %633, %v556
    %v635 = vpop.permute.xlu0 %634
    %v637 = vmul.f32 %v560, %v367
    %v638 = vmul.f32 %v565, %v370
    %v639 = vmul.f32 %v570, %v375
    %v640 = vmul.f32 %v575, %v378
    %v641 = vmul.f32 %v580, %v383
    %v642 = vmul.f32 %v585, %v386
    %v643 = vmul.f32 %v590, %v391
    %v644 = vmul.f32 %v595, %v394
    %v645 = vmul.f32 %v600, %v399
    %v646 = vmul.f32 %v605, %v402
    %v647 = vmul.f32 %v610, %v407
    %v648 = vmul.f32 %v615, %v410
    %v649 = vmul.f32 %v620, %v415
    %v650 = vmul.f32 %v625, %v418
    %v651 = vmul.f32 %v630, %v423
    %v652 = vmul.f32 %v635, %v426
    %v653 = vadd.f32 %v525, %v637
    %v654 = vadd.f32 %v526, %v638
    %v655 = vadd.f32 %v527, %v639
    %v656 = vadd.f32 %v528, %v640
    %v657 = vadd.f32 %v529, %v641
    %v658 = vadd.f32 %v530, %v642
    %v659 = vadd.f32 %v531, %v643
    %v660 = vadd.f32 %v532, %v644
    %v661 = vadd.f32 %v533, %v645
    %v662 = vadd.f32 %v534, %v646
    %v663 = vadd.f32 %v535, %v647
    %v664 = vadd.f32 %v536, %v648
    %v665 = vadd.f32 %v537, %v649
    %v666 = vadd.f32 %v538, %v650
    %v667 = vadd.f32 %v539, %v651
    %v668 = vadd.f32 %v540, %v652
    %v669 = vld [vmem:[%s6] sm:$0x1]
    %v671 = vlaneseq
    %v672 = vshrl.u32 %v671, 7
    %v673 = vsub.s32 0, %v672
    %v674 = vrot.slane %v669, %v673
    %v676 = vadd.f32 %v653, %v674
    %v677 = vadd.f32 %v654, %v674
    %v678 = vadd.f32 %v655, %v674
    %v679 = vadd.f32 %v656, %v674
    %v680 = vadd.f32 %v657, %v674
    %v681 = vadd.f32 %v658, %v674
    %v682 = vadd.f32 %v659, %v674
    %v683 = vadd.f32 %v660, %v674
    %v684 = vadd.f32 %v661, %v674
    %v685 = vadd.f32 %v662, %v674
    %v686 = vadd.f32 %v663, %v674
    %v687 = vadd.f32 %v664, %v674
    %v688 = vadd.f32 %v665, %v674
    %v689 = vadd.f32 %v666, %v674
    %v690 = vadd.f32 %v667, %v674
    %v691 = vadd.f32 %v668, %v674
    %v692 = vpack.c.bf16 %v677, %v676
    %v693 = vpack.c.bf16 %v679, %v678
    %v694 = vpack.c.bf16 %v681, %v680
    %v695 = vpack.c.bf16 %v683, %v682
    %v696 = vpack.c.bf16 %v685, %v684
    %v697 = vpack.c.bf16 %v687, %v686
    %v698 = vpack.c.bf16 %v689, %v688
    %v699 = vpack.c.bf16 %v691, %v690
    %v708 = vunpack.c.l.b16 %v692
    %v709 = vunpack.c.h.b16 %v692
    %v710 = vunpack.c.l.b16 %v693
    %v711 = vunpack.c.h.b16 %v693
    %v712 = vunpack.c.l.b16 %v694
    %v713 = vunpack.c.h.b16 %v694
    %v714 = vunpack.c.l.b16 %v695
    %v715 = vunpack.c.h.b16 %v695
    %v716 = vunpack.c.l.b16 %v696
    %v717 = vunpack.c.h.b16 %v696
    %v718 = vunpack.c.l.b16 %v697
    %v719 = vunpack.c.h.b16 %v697
    %v720 = vunpack.c.l.b16 %v698
    %v721 = vunpack.c.h.b16 %v698
    %v722 = vunpack.c.l.b16 %v699
    %v723 = vunpack.c.h.b16 %v699
    %v724 = vpack.c.b16 %v708, %v708
    %v725 = vpack.c.b16 %v709, %v709
    %v726 = vpack.c.b16 %v710, %v710
    %v727 = vpack.c.b16 %v711, %v711
    %v728 = vpack.c.b16 %v712, %v712
    %v729 = vpack.c.b16 %v713, %v713
    %v730 = vpack.c.b16 %v714, %v714
    %v731 = vpack.c.b16 %v715, %v715
    %v732 = vpack.c.b16 %v716, %v716
    %v733 = vpack.c.b16 %v717, %v717
    %v734 = vpack.c.b16 %v718, %v718
    %v735 = vpack.c.b16 %v719, %v719
    %v736 = vpack.c.b16 %v720, %v720
    %v737 = vpack.c.b16 %v721, %v721
    %v738 = vpack.c.b16 %v722, %v722
    %v739 = vpack.c.b16 %v723, %v723
    %756 = vst [vmem:[#allocation2] sm:$0xf] %v724
    %757 = vst [vmem:[#allocation2 + $0x4] sm:$0xf] %v725
    %758 = vst [vmem:[#allocation2 + $0x8] sm:$0xf] %v726
    %759 = vst [vmem:[#allocation2 + $0xc] sm:$0xf] %v727
    %760 = vst [vmem:[#allocation2 + $0x10] sm:$0xf] %v728
    %761 = vst [vmem:[#allocation2 + $0x14] sm:$0xf] %v729
    %762 = vst [vmem:[#allocation2 + $0x18] sm:$0xf] %v730
    %763 = vst [vmem:[#allocation2 + $0x1c] sm:$0xf] %v731
    %764 = vst [vmem:[#allocation2 + $0x20] sm:$0xf] %v732
    %765 = vst [vmem:[#allocation2 + $0x24] sm:$0xf] %v733
    %766 = vst [vmem:[#allocation2 + $0x28] sm:$0xf] %v734
    %767 = vst [vmem:[#allocation2 + $0x2c] sm:$0xf] %v735
    %768 = vst [vmem:[#allocation2 + $0x30] sm:$0xf] %v736
    %769 = vst [vmem:[#allocation2 + $0x34] sm:$0xf] %v737
    %770 = vst [vmem:[#allocation2 + $0x38] sm:$0xf] %v738
    %771 = vst [vmem:[#allocation2 + $0x3c] sm:$0xf] %v739
    %s772 = smul.u32 0, 128
    %v773 = vlaneseq
    %v774 = vshrl.u32 %v773, 7
    %v775 = vadd.s32 %v774, 8
    %v776 = vadd.s32 %v774, 16
    %v777 = vadd.s32 %v774, 24
    %v778 = vadd.s32 %v774, 32
    %v779 = vadd.s32 %v774, 40
    %v780 = vadd.s32 %v774, 48
    %v781 = vadd.s32 %v774, 56
    %v782 = vadd.s32 %v774, 64
    %v783 = vadd.s32 %v774, 72
    %v784 = vadd.s32 %v774, 80
    %v785 = vadd.s32 %v774, 88
    %v786 = vadd.s32 %v774, 96
    %v787 = vadd.s32 %v774, 104
    %v788 = vadd.s32 %v774, 112
    %v789 = vadd.s32 %v774, 120
    %v790 = vstv %s772
    %v791 = vadd.s32 %v774, %v790
    %v792 = vadd.s32 %v775, %v790
    %v793 = vadd.s32 %v776, %v790
    %v794 = vadd.s32 %v777, %v790
    %v795 = vadd.s32 %v778, %v790
    %v796 = vadd.s32 %v779, %v790
    %v797 = vadd.s32 %v780, %v790
    %v798 = vadd.s32 %v781, %v790
    %v799 = vadd.s32 %v782, %v790
    %v800 = vadd.s32 %v783, %v790
    %v801 = vadd.s32 %v784, %v790
    %v802 = vadd.s32 %v785, %v790
    %v803 = vadd.s32 %v786, %v790
    %v804 = vadd.s32 %v787, %v790
    %v805 = vadd.s32 %v788, %v790
    %v806 = vadd.s32 %v789, %v790
    %vm807 = vcmp.lt.s32.totalorder %v791, 16
    %vm808 = vcmp.lt.s32.totalorder %v792, 16
    %vm809 = vcmp.lt.s32.totalorder %v793, 16
    %vm810 = vcmp.lt.s32.totalorder %v794, 16
    %vm811 = vcmp.lt.s32.totalorder %v795, 16
    %vm812 = vcmp.lt.s32.totalorder %v796, 16
    %vm813 = vcmp.lt.s32.totalorder %v797, 16
    %vm814 = vcmp.lt.s32.totalorder %v798, 16
    %vm815 = vcmp.lt.s32.totalorder %v799, 16
    %vm816 = vcmp.lt.s32.totalorder %v800, 16
    %vm817 = vcmp.lt.s32.totalorder %v801, 16
    %vm818 = vcmp.lt.s32.totalorder %v802, 16
    %vm819 = vcmp.lt.s32.totalorder %v803, 16
    %vm820 = vcmp.lt.s32.totalorder %v804, 16
    %vm821 = vcmp.lt.s32.totalorder %v805, 16
    %vm822 = vcmp.lt.s32.totalorder %v806, 16
    %v823 = vsel %vm807, 1, 0
    %v824 = vsel %vm808, 1, 0
    %v825 = vsel %vm809, 1, 0
    %v826 = vsel %vm810, 1, 0
    %v827 = vsel %vm811, 1, 0
    %v828 = vsel %vm812, 1, 0
    %v829 = vsel %vm813, 1, 0
    %v830 = vsel %vm814, 1, 0
    %v831 = vsel %vm815, 1, 0
    %v832 = vsel %vm816, 1, 0
    %v833 = vsel %vm817, 1, 0
    %v834 = vsel %vm818, 1, 0
    %v835 = vsel %vm819, 1, 0
    %v836 = vsel %vm820, 1, 0
    %v837 = vsel %vm821, 1, 0
    %v838 = vsel %vm822, 1, 0
    %vm839 = vcmp.eq.s32.totalorder %v823, 1
    %vm840 = vcmp.eq.s32.totalorder %v824, 1
    %vm841 = vcmp.eq.s32.totalorder %v825, 1
    %vm842 = vcmp.eq.s32.totalorder %v826, 1
    %vm843 = vcmp.eq.s32.totalorder %v827, 1
    %vm844 = vcmp.eq.s32.totalorder %v828, 1
    %vm845 = vcmp.eq.s32.totalorder %v829, 1
    %vm846 = vcmp.eq.s32.totalorder %v830, 1
    %vm847 = vcmp.eq.s32.totalorder %v831, 1
    %vm848 = vcmp.eq.s32.totalorder %v832, 1
    %vm849 = vcmp.eq.s32.totalorder %v833, 1
    %vm850 = vcmp.eq.s32.totalorder %v834, 1
    %vm851 = vcmp.eq.s32.totalorder %v835, 1
    %vm852 = vcmp.eq.s32.totalorder %v836, 1
    %vm853 = vcmp.eq.s32.totalorder %v837, 1
    %vm854 = vcmp.eq.s32.totalorder %v838, 1
    %v855 = vsel %vm839, %v676, 0.0
    %v856 = vsel %vm840, %v677, 0.0
    %v857 = vsel %vm841, %v678, 0.0
    %v858 = vsel %vm842, %v679, 0.0
    %v859 = vsel %vm843, %v680, 0.0
    %v860 = vsel %vm844, %v681, 0.0
    %v861 = vsel %vm845, %v682, 0.0
    %v862 = vsel %vm846, %v683, 0.0
    %v863 = vsel %vm847, %v684, 0.0
    %v864 = vsel %vm848, %v685, 0.0
    %v865 = vsel %vm849, %v686, 0.0
    %v866 = vsel %vm850, %v687, 0.0
    %v867 = vsel %vm851, %v688, 0.0
    %v868 = vsel %vm852, %v689, 0.0
    %v869 = vsel %vm853, %v690, 0.0
    %v870 = vsel %vm854, %v691, 0.0
    %v871 = vadd.f32 %v855, %v856
    %v872 = vadd.f32 %v871, %v857
    %v873 = vadd.f32 %v872, %v858
    %v874 = vadd.f32 %v873, %v859
    %v875 = vadd.f32 %v874, %v860
    %v876 = vadd.f32 %v875, %v861
    %v877 = vadd.f32 %v876, %v862
    %v878 = vadd.f32 %v877, %v863
    %v879 = vadd.f32 %v878, %v864
    %v880 = vadd.f32 %v879, %v865
    %v881 = vadd.f32 %v880, %v866
    %v882 = vadd.f32 %v881, %v867
    %v883 = vadd.f32 %v882, %v868
    %v884 = vadd.f32 %v883, %v869
    %v885 = vadd.f32 %v884, %v870
    %v886 = vrot.slane %v885, 4
    %v887 = vadd.f32 %v885, %v886
    %v888 = vrot.slane %v887, 2
    %v889 = vadd.f32 %v887, %v888
    %v890 = vrot.slane %v889, 1
    %v891 = vadd.f32 %v889, %v890
    %892 = vst [vmem:[#allocation4] sm:$0x1] %v891
    %v893 = vmul.f32 %v855, %v855
    %v894 = vmul.f32 %v856, %v856
    %v895 = vmul.f32 %v857, %v857
    %v896 = vmul.f32 %v858, %v858
    %v897 = vmul.f32 %v859, %v859
    %v898 = vmul.f32 %v860, %v860
    %v899 = vmul.f32 %v861, %v861
    %v900 = vmul.f32 %v862, %v862
    %v901 = vmul.f32 %v863, %v863
    %v902 = vmul.f32 %v864, %v864
    %v903 = vmul.f32 %v865, %v865
    %v904 = vmul.f32 %v866, %v866
    %v905 = vmul.f32 %v867, %v867
    %v906 = vmul.f32 %v868, %v868
    %v907 = vmul.f32 %v869, %v869
    %v908 = vmul.f32 %v870, %v870
    %v909 = vadd.f32 %v893, %v894
    %v910 = vadd.f32 %v909, %v895
    %v911 = vadd.f32 %v910, %v896
    %v912 = vadd.f32 %v911, %v897
    %v913 = vadd.f32 %v912, %v898
    %v914 = vadd.f32 %v913, %v899
    %v915 = vadd.f32 %v914, %v900
    %v916 = vadd.f32 %v915, %v901
    %v917 = vadd.f32 %v916, %v902
    %v918 = vadd.f32 %v917, %v903
    %v919 = vadd.f32 %v918, %v904
    %v920 = vadd.f32 %v919, %v905
    %v921 = vadd.f32 %v920, %v906
    %v922 = vadd.f32 %v921, %v907
    %v923 = vadd.f32 %v922, %v908
    %v924 = vrot.slane %v923, 4
    %v925 = vadd.f32 %v923, %v924
    %v926 = vrot.slane %v925, 2
    %v927 = vadd.f32 %v925, %v926
    %v928 = vrot.slane %v927, 1
    %v929 = vadd.f32 %v927, %v928
    %930 = vst [vmem:[#allocation4 + $0x1] sm:$0x1] %v929
    // Predicated region
    $region30: #{tpu_custom_call.1} parent=1 // pred_check
      _
    $region31: #{tpu_custom_call.1} parent=1 // pred_check_branch
      %932 = sbr.rel (0) target = $region33
    $region32: #{tpu_custom_call.1} parent=1 // pred_region
      %s934 = ssub.s32 1024, 1024
      %935 = vsyncadd [#allocation3], %s934
      %s936 = sshll.u32 [#allocation2], 4
      %s937 = int_to_ptr.vmem [resolvable:$true] %s936
      %942 = dma.vmem_to_hbm [thread:$0]  %s937, 1024, %s7, [#allocation3], 64, 64, 4
    $region33: #{tpu_custom_call.1} parent=1 // pred_fallthru
      _
    // Predicated region
    $region34: #{tpu_custom_call.1} parent=1 // pred_check
      _
    $region35: #{tpu_custom_call.1} parent=1 // pred_check_branch
      %944 = sbr.rel (0) target = $region37
    $region36: #{tpu_custom_call.1} parent=1 // pred_region
      %s946 = ssub.s32 128, 128
      %947 = vsyncadd [#allocation5], %s946
      %s949 = sshll.u32 [#allocation4], 4
      %s950 = int_to_ptr.vmem [resolvable:$true] %s949
      %952 = dma.vmem_to_hbm [thread:$0]  %s950, 128, %s8, [#allocation5]
    $region37: #{tpu_custom_call.1} parent=1 // pred_fallthru
      _
    // Predicated region
    $region38: #{tpu_custom_call.1} parent=1 // pred_check
      _
    $region39: #{tpu_custom_call.1} parent=1 // pred_check_branch
      %954 = sbr.rel (0) target = $region41
    $region40: #{tpu_custom_call.1} parent=1 // pred_region
      %955 = dma.done [#allocation3], 1024
    $region41: #{tpu_custom_call.1} parent=1 // pred_fallthru
      _
    // Predicated region
    $region42: #{tpu_custom_call.1} parent=1 // pred_check
      _
    $region43: #{tpu_custom_call.1} parent=1 // pred_check_branch
      %957 = sbr.rel (0) target = $region45
    $region44: #{tpu_custom_call.1} parent=1 // pred_region
      %958 = dma.done [#allocation5], 128
    $region45: #{tpu_custom_call.1} parent=1 // pred_fallthru
      _
    %959 = vsyncpa [#allocation3], 1
    %960 = vsyncpa [#allocation5], 1

</llo_original>
